<compile_context>
chip_gen: v7x
topology: tpu7x:2x2x1
jax: 0.10.0
libtpu: 0.0.40
codegen_flags: <defaults>
</compile_context>

<pallas_src>
import functools

import jax
import jax.numpy as jnp
from jax import lax
from jax.experimental import pallas as pl
from jax.experimental.pallas import tpu as pltpu


# ---------------------------------------------------------------------------
# Fused kernel: one batch element per grid step.
#   x_ref    : (1, cin, S)       flattened input (S = H*W)
#   dwk_ref  : (cin, 9)          depthwise 3x3 taps (row-major)
#   cmask_ref: (2, S)            column-validity masks (row 0: col!=0, row 1: col!=W-1)
#   w1_ref   : (cmid, cin)       1x1 conv #1 weights with BN scale folded in
#   b1_ref   : (cmid, 1)         folded BN bias #1
#   sel_ref  : (S, So)           0/1 stride-2 subsample selection (So = Ho*Wo)
#   w2_ref   : (cout, cmid)      1x1 conv #2 weights with BN scale folded in
#   b2_ref   : (cout, 1)         folded BN bias #2
#   o_ref    : (1, cout, So)
#   xs_ref   : (cin,  S+2*pad)   VMEM scratch (zero row-halo for the conv)
#   ys_ref   : (cmid, S+2*pad)   VMEM scratch (-inf row-halo for the pool)
# ---------------------------------------------------------------------------
def _skip_block_kernel(x_ref, dwk_ref, cmask_ref, w1_ref, b1_ref, sel_ref,
                       w2_ref, b2_ref, o_ref, xs_ref, ys_ref, *, h, w, pad):
    s = h * w
    cin = x_ref.shape[1]

    mask_l = cmask_ref[0:1, :]          # (1, S): 0 where col == 0
    mask_r = cmask_ref[1:2, :]          # (1, S): 0 where col == w-1
    taps = [(dr, dc) for dr in (-1, 0, 1) for dc in (-1, 0, 1)]

    # ---- stage 0: stage x into a zero end-padded flat scratch (row halo) ----
    xs_ref[:, 0:pad] = jnp.zeros((cin, pad), jnp.float32)
    xs_ref[:, pad + s:pad + s + pad] = jnp.zeros((cin, pad), jnp.float32)
    xs_ref[:, pad:pad + s] = x_ref[0]
    xsv = xs_ref[...]                    # (cin, S + 2*pad)

    # ---- stage 1: depthwise 3x3, stride 1, zero pad 1 (VPU, lane-dense) -----
    kmat = dwk_ref[...]                  # (cin, 9)
    dw = jnp.zeros((cin, s), jnp.float32)
    for t, (dr, dc) in enumerate(taps):
        off = pad + dr * w + dc
        v = xsv[:, off:off + s]          # shifted flat view, (cin, S)
        if dc == -1:
            v = v * mask_l
        elif dc == 1:
            v = v * mask_r
        dw = dw + v * kmat[:, t:t + 1]

    # ---- stage 2: 1x1 conv (+BN fold) + bias + hardswish (MXU + VPU) --------
    y1 = jnp.dot(w1_ref[...], dw, preferred_element_type=jnp.float32)  # (cmid, S)
    y1 = y1 + b1_ref[...]
    y1 = y1 * jnp.clip(y1 + 3.0, 0.0, 6.0) * (1.0 / 6.0)

    # ---- stage 3: MaxPool2d(3, stride=2, pad=1) ------------------------------
    # stride-1 3x3 max via 9 shifted slices of a -inf end-padded scratch,
    # then the stride-2 gather as a 0/1 selection matmul on the MXU.
    cmid = y1.shape[0]
    ys_ref[:, 0:pad] = jnp.full((cmid, pad), -1e30, jnp.float32)
    ys_ref[:, pad + s:pad + s + pad] = jnp.full((cmid, pad), -1e30, jnp.float32)
    ys_ref[:, pad:pad + s] = y1
    ysv = ys_ref[...]                    # (cmid, S + 2*pad)

    m = None
    for (dr, dc) in taps:
        off = pad + dr * w + dc
        v = ysv[:, off:off + s]          # (cmid, S)
        if dc == -1:
            v = jnp.where(mask_l != 0.0, v, -1e30)
        elif dc == 1:
            v = jnp.where(mask_r != 0.0, v, -1e30)
        m = v if m is None else jnp.maximum(m, v)

    pooled = jnp.dot(m, sel_ref[...], preferred_element_type=jnp.float32)  # (cmid, So)

    # ---- stage 4: 1x1 conv (+BN fold) + bias + hardswish ---------------------
    y2 = jnp.dot(w2_ref[...], pooled, preferred_element_type=jnp.float32)  # (cout, So)
    y2 = y2 + b2_ref[...]
    y2 = y2 * jnp.clip(y2 + 3.0, 0.0, 6.0) * (1.0 / 6.0)
    o_ref[0] = y2.astype(o_ref.dtype)


# ---------------------------------------------------------------------------
# Full Skip_block forward.
# ---------------------------------------------------------------------------
@functools.partial(jax.jit, static_argnames=("eps",))
def skip_block_forward(x, dw_w, pw1_w, bn1, pw2_w, bn2, eps=1e-5):
    n, cin, h, w = x.shape
    cmid = pw1_w.shape[0]
    cout = pw2_w.shape[0]
    s = h * w
    ho = (h - 1) // 2 + 1
    wo = (w - 1) // 2 + 1
    so = ho * wo
    pad = int(pl.cdiv(w + 1, 128) * 128)          # lane-aligned row-halo width

    g1, be1, mu1, v1 = bn1
    g2, be2, mu2, v2 = bn2
    sc1 = g1 / jnp.sqrt(v1 + eps)
    sc2 = g2 / jnp.sqrt(v2 + eps)
    w1f = (pw1_w * sc1[:, None]).astype(jnp.float32)          # fold BN scale
    b1v = (be1 - mu1 * sc1).reshape(cmid, 1).astype(jnp.float32)
    w2f = (pw2_w * sc2[:, None]).astype(jnp.float32)
    b2v = (be2 - mu2 * sc2).reshape(cout, 1).astype(jnp.float32)

    dwk = dw_w.reshape(cin, 9).astype(jnp.float32)

    # Column-validity masks for the flattened shifts (handle the W-axis halo).
    col = jnp.arange(s, dtype=jnp.int32) % w
    cmask = jnp.stack([(col != 0), (col != (w - 1))]).astype(jnp.float32)   # (2, S)

    # Stride-2 subsample selection: out flat k = i*wo + j  <-  m flat 2*i*w + 2*j.
    k = jnp.arange(so, dtype=jnp.int32)
    src = 2 * (k // wo) * w + 2 * (k % wo)
    sel = (jnp.arange(s, dtype=jnp.int32)[:, None] == src[None, :]).astype(jnp.float32)

    x_flat = x.reshape(n, cin, s).astype(jnp.float32)         # metadata-only reshape

    kern = functools.partial(_skip_block_kernel, h=h, w=w, pad=pad)
    out = pl.pallas_call(
        kern,
        out_shape=jax.ShapeDtypeStruct((n, cout, so), jnp.float32),
        grid_spec=pltpu.PrefetchScalarGridSpec(
            num_scalar_prefetch=0,
            grid=(n,),
            in_specs=[
                pl.BlockSpec((1, cin, s), lambda i: (i, 0, 0)),
                pl.BlockSpec((cin, 9), lambda i: (0, 0)),
                pl.BlockSpec((2, s), lambda i: (0, 0)),
                pl.BlockSpec((cmid, cin), lambda i: (0, 0)),
                pl.BlockSpec((cmid, 1), lambda i: (0, 0)),
                pl.BlockSpec((s, so), lambda i: (0, 0)),
                pl.BlockSpec((cout, cmid), lambda i: (0, 0)),
                pl.BlockSpec((cout, 1), lambda i: (0, 0)),
            ],
            out_specs=pl.BlockSpec((1, cout, so), lambda i: (i, 0, 0)),
            scratch_shapes=[
                pltpu.VMEM((cin, s + 2 * pad), jnp.float32),
                pltpu.VMEM((cmid, s + 2 * pad), jnp.float32),
            ],
        ),
        compiler_params=pltpu.CompilerParams(
            dimension_semantics=("parallel",)),
    )(x_flat, dwk, cmask, w1f, b1v, sel, w2f, b2v)

    return out.reshape(n, cout, ho, wo)


# ---------------------------------------------------------------------------
# Pure-JAX reference (same math, no Pallas).
# ---------------------------------------------------------------------------
def reference_forward(x, dw_w, pw1_w, bn1, pw2_w, bn2, eps=1e-5):
    n, cin, h, w = x.shape
    g1, b1, mu1, v1 = bn1
    g2, b2, mu2, v2 = bn2

    y = lax.conv_general_dilated(
        x, dw_w.reshape(cin, 1, 3, 3), window_strides=(1, 1),
        padding=((1, 1), (1, 1)),
        dimension_numbers=("NCHW", "OIHW", "NCHW"),
        feature_group_count=cin)
    y = jnp.einsum("oc,nchw->nohw", pw1_w, y)
    s1 = g1 / jnp.sqrt(v1 + eps)
    y = y * s1[None, :, None, None] + (b1 - mu1 * s1)[None, :, None, None]
    y = y * jnp.clip(y + 3.0, 0.0, 6.0) / 6.0

    y = lax.reduce_window(y, -jnp.inf, lax.max, (1, 1, 3, 3), (1, 1, 2, 2),
                          ((0, 0), (0, 0), (1, 1), (1, 1)))

    y = jnp.einsum("oc,nchw->nohw", pw2_w, y)
    s2 = g2 / jnp.sqrt(v2 + eps)
    y = y * s2[None, :, None, None] + (b2 - mu2 * s2)[None, :, None, None]
    y = y * jnp.clip(y + 3.0, 0.0, 6.0) / 6.0
    return y


if __name__ == "__main__":
    key = jax.random.PRNGKey(0)
    keys = jax.random.split(key, 12)

    N, CIN, CMID, H, W = 2, 4, 8, 16, 16
    COUT = 2 * CMID

    x = jax.random.normal(keys[0], (N, CIN, H, W), dtype=jnp.float32)
    dw_w = jax.random.normal(keys[1], (CIN, 3, 3), dtype=jnp.float32) * 0.2
    pw1_w = jax.random.normal(keys[2], (CMID, CIN), dtype=jnp.float32) * 0.3
    bn1 = (1.0 + 0.1 * jax.random.normal(keys[3], (CMID,), jnp.float32),
           0.1 * jax.random.normal(keys[4], (CMID,), jnp.float32),
           0.05 * jax.random.normal(keys[5], (CMID,), jnp.float32),
           1.0 + 0.1 * jax.random.uniform(keys[6], (CMID,), jnp.float32))
    pw2_w = jax.random.normal(keys[7], (COUT, CMID), dtype=jnp.float32) * 0.2
    bn2 = (1.0 + 0.1 * jax.random.normal(keys[8], (COUT,), jnp.float32),
           0.1 * jax.random.normal(keys[9], (COUT,), jnp.float32),
           0.05 * jax.random.normal(keys[10], (COUT,), jnp.float32),
           1.0 + 0.1 * jax.random.uniform(keys[11], (COUT,), jnp.float32))

    out = skip_block_forward(x, dw_w, pw1_w, bn1, pw2_w, bn2)
    out = jax.block_until_ready(out)

    ref = reference_forward(x, dw_w, pw1_w, bn1, pw2_w, bn2)
    assert out.shape == (N, COUT, H // 2, W // 2), out.shape
    err = float(jnp.max(jnp.abs(out - ref)))
    assert jnp.allclose(out, ref, atol=1e-3, rtol=1e-3), f"mismatch, max err {err}"

    print("KERNEL_OK")
</pallas_src>

<mosaic_0001>
module attributes {stable_mosaic.version = 11 : i64} {
  func.func @_skip_block_kernel(%arg0: i32, %arg1: memref<1x4x256xf32, #tpu.memory_space<vmem>>, %arg2: memref<4x9xf32, #tpu.memory_space<vmem>>, %arg3: memref<2x256xf32, #tpu.memory_space<vmem>>, %arg4: memref<8x4xf32, #tpu.memory_space<vmem>>, %arg5: memref<8x1xf32, #tpu.memory_space<vmem>>, %arg6: memref<256x64xf32, #tpu.memory_space<vmem>>, %arg7: memref<16x8xf32, #tpu.memory_space<vmem>>, %arg8: memref<16x1xf32, #tpu.memory_space<vmem>>, %arg9: memref<1x16x64xf32, #tpu.memory_space<vmem>>, %arg10: memref<4x512xf32, #tpu.memory_space<vmem>>, %arg11: memref<8x512xf32, #tpu.memory_space<vmem>>) attributes {dimension_semantics = [#tpu.dimension_semantics<parallel>], iteration_bounds = array<i64: 2>, scalar_prefetch = 0 : i64, scratch_operands = 2 : i64, tpu.core_type = #tpu.core_type<tc>, window_params = [{transform_indices = @transform_0, window_bounds = array<i64: 1, 4, 256>}, {pipeline_mode = #tpu.pipeline_mode<synchronous>, transform_indices = @transform_1, window_bounds = array<i64: 4, 9>}, {pipeline_mode = #tpu.pipeline_mode<synchronous>, transform_indices = @transform_2, window_bounds = array<i64: 2, 256>}, {pipeline_mode = #tpu.pipeline_mode<synchronous>, transform_indices = @transform_3, window_bounds = array<i64: 8, 4>}, {pipeline_mode = #tpu.pipeline_mode<synchronous>, transform_indices = @transform_4, window_bounds = array<i64: 8, 1>}, {pipeline_mode = #tpu.pipeline_mode<synchronous>, transform_indices = @transform_5, window_bounds = array<i64: 256, 64>}, {pipeline_mode = #tpu.pipeline_mode<synchronous>, transform_indices = @transform_6, window_bounds = array<i64: 16, 8>}, {pipeline_mode = #tpu.pipeline_mode<synchronous>, transform_indices = @transform_7, window_bounds = array<i64: 16, 1>}, {transform_indices = @transform_8, window_bounds = array<i64: 1, 16, 64>}]} {
    %c0 = arith.constant 0 : index
    %c0_0 = arith.constant 0 : index
    %0 = vector.load %arg3[%c0, %c0_0] : memref<2x256xf32, #tpu.memory_space<vmem>>, vector<1x256xf32>
    %c1 = arith.constant 1 : index
    %c0_1 = arith.constant 0 : index
    %1 = vector.load %arg3[%c1, %c0_1] : memref<2x256xf32, #tpu.memory_space<vmem>>, vector<1x256xf32>
    %cst = arith.constant 0.000000e+00 : f32
    %2 = vector.broadcast %cst : f32 to vector<4x128xf32>
    %c0_2 = arith.constant 0 : index
    %c0_3 = arith.constant 0 : index
    %3 = vector.load %arg10[%c0_2, %c0_3] : memref<4x512xf32, #tpu.memory_space<vmem>>, vector<4x128xf32>
    tpu.vector_store %arg10[%c0_2, %c0_3], %2 {strides = array<i32>} : memref<4x512xf32, #tpu.memory_space<vmem>>, vector<4x128xf32>,
    %cst_4 = arith.constant 0.000000e+00 : f32
    %4 = vector.broadcast %cst_4 : f32 to vector<4x128xf32>
    %c0_5 = arith.constant 0 : index
    %c384 = arith.constant 384 : index
    %5 = vector.load %arg10[%c0_5, %c384] : memref<4x512xf32, #tpu.memory_space<vmem>>, vector<4x128xf32>
    tpu.vector_store %arg10[%c0_5, %c384], %4 {strides = array<i32>} : memref<4x512xf32, #tpu.memory_space<vmem>>, vector<4x128xf32>,
    %c0_6 = arith.constant 0 : index
    %c0_7 = arith.constant 0 : index
    %c0_8 = arith.constant 0 : index
    %6 = vector.load %arg1[%c0_6, %c0_7, %c0_8] : memref<1x4x256xf32, #tpu.memory_space<vmem>>, vector<1x4x256xf32>
    %7 = vector.shape_cast %6 : vector<1x4x256xf32> to vector<4x256xf32>
    %c0_9 = arith.constant 0 : index
    %c128 = arith.constant 128 : index
    %8 = vector.load %arg10[%c0_9, %c128] : memref<4x512xf32, #tpu.memory_space<vmem>>, vector<4x256xf32>
    tpu.vector_store %arg10[%c0_9, %c128], %7 {strides = array<i32>} : memref<4x512xf32, #tpu.memory_space<vmem>>, vector<4x256xf32>,
    %c0_10 = arith.constant 0 : index
    %c0_11 = arith.constant 0 : index
    %9 = vector.load %arg10[%c0_10, %c0_11] : memref<4x512xf32, #tpu.memory_space<vmem>>, vector<4x512xf32>
    %c0_12 = arith.constant 0 : index
    %c0_13 = arith.constant 0 : index
    %10 = vector.load %arg2[%c0_12, %c0_13] : memref<4x9xf32, #tpu.memory_space<vmem>>, vector<4x9xf32>
    %cst_14 = arith.constant 0.000000e+00 : f32
    %11 = vector.broadcast %cst_14 : f32 to vector<4x256xf32>
    %12 = vector.extract_strided_slice %9 {offsets = [0, 111], sizes = [4, 256], strides = [1, 1]} : vector<4x512xf32> to vector<4x256xf32>
    %13 = vector.broadcast %0 : vector<1x256xf32> to vector<4x256xf32>
    %14 = arith.mulf %12, %13 : vector<4x256xf32>
    %15 = vector.extract_strided_slice %10 {offsets = [0, 0], sizes = [4, 1], strides = [1, 1]} : vector<4x9xf32> to vector<4x1xf32>
    %16 = vector.broadcast %15 : vector<4x1xf32> to vector<4x256xf32>
    %17 = arith.mulf %14, %16 : vector<4x256xf32>
    %18 = arith.addf %11, %17 : vector<4x256xf32>
    %19 = vector.extract_strided_slice %9 {offsets = [0, 112], sizes = [4, 256], strides = [1, 1]} : vector<4x512xf32> to vector<4x256xf32>
    %20 = vector.extract_strided_slice %10 {offsets = [0, 1], sizes = [4, 1], strides = [1, 1]} : vector<4x9xf32> to vector<4x1xf32>
    %21 = vector.broadcast %20 : vector<4x1xf32> to vector<4x256xf32>
    %22 = arith.mulf %19, %21 : vector<4x256xf32>
    %23 = arith.addf %18, %22 : vector<4x256xf32>
    %24 = vector.extract_strided_slice %9 {offsets = [0, 113], sizes = [4, 256], strides = [1, 1]} : vector<4x512xf32> to vector<4x256xf32>
    %25 = vector.broadcast %1 : vector<1x256xf32> to vector<4x256xf32>
    %26 = arith.mulf %24, %25 : vector<4x256xf32>
    %27 = vector.extract_strided_slice %10 {offsets = [0, 2], sizes = [4, 1], strides = [1, 1]} : vector<4x9xf32> to vector<4x1xf32>
    %28 = vector.broadcast %27 : vector<4x1xf32> to vector<4x256xf32>
    %29 = arith.mulf %26, %28 : vector<4x256xf32>
    %30 = arith.addf %23, %29 : vector<4x256xf32>
    %31 = vector.extract_strided_slice %9 {offsets = [0, 127], sizes = [4, 256], strides = [1, 1]} : vector<4x512xf32> to vector<4x256xf32>
    %32 = vector.broadcast %0 : vector<1x256xf32> to vector<4x256xf32>
    %33 = arith.mulf %31, %32 : vector<4x256xf32>
    %34 = vector.extract_strided_slice %10 {offsets = [0, 3], sizes = [4, 1], strides = [1, 1]} : vector<4x9xf32> to vector<4x1xf32>
    %35 = vector.broadcast %34 : vector<4x1xf32> to vector<4x256xf32>
    %36 = arith.mulf %33, %35 : vector<4x256xf32>
    %37 = arith.addf %30, %36 : vector<4x256xf32>
    %38 = vector.extract_strided_slice %9 {offsets = [0, 128], sizes = [4, 256], strides = [1, 1]} : vector<4x512xf32> to vector<4x256xf32>
    %39 = vector.extract_strided_slice %10 {offsets = [0, 4], sizes = [4, 1], strides = [1, 1]} : vector<4x9xf32> to vector<4x1xf32>
    %40 = vector.broadcast %39 : vector<4x1xf32> to vector<4x256xf32>
    %41 = arith.mulf %38, %40 : vector<4x256xf32>
    %42 = arith.addf %37, %41 : vector<4x256xf32>
    %43 = vector.extract_strided_slice %9 {offsets = [0, 129], sizes = [4, 256], strides = [1, 1]} : vector<4x512xf32> to vector<4x256xf32>
    %44 = vector.broadcast %1 : vector<1x256xf32> to vector<4x256xf32>
    %45 = arith.mulf %43, %44 : vector<4x256xf32>
    %46 = vector.extract_strided_slice %10 {offsets = [0, 5], sizes = [4, 1], strides = [1, 1]} : vector<4x9xf32> to vector<4x1xf32>
    %47 = vector.broadcast %46 : vector<4x1xf32> to vector<4x256xf32>
    %48 = arith.mulf %45, %47 : vector<4x256xf32>
    %49 = arith.addf %42, %48 : vector<4x256xf32>
    %50 = vector.extract_strided_slice %9 {offsets = [0, 143], sizes = [4, 256], strides = [1, 1]} : vector<4x512xf32> to vector<4x256xf32>
    %51 = vector.broadcast %0 : vector<1x256xf32> to vector<4x256xf32>
    %52 = arith.mulf %50, %51 : vector<4x256xf32>
    %53 = vector.extract_strided_slice %10 {offsets = [0, 6], sizes = [4, 1], strides = [1, 1]} : vector<4x9xf32> to vector<4x1xf32>
    %54 = vector.broadcast %53 : vector<4x1xf32> to vector<4x256xf32>
    %55 = arith.mulf %52, %54 : vector<4x256xf32>
    %56 = arith.addf %49, %55 : vector<4x256xf32>
    %57 = vector.extract_strided_slice %9 {offsets = [0, 144], sizes = [4, 256], strides = [1, 1]} : vector<4x512xf32> to vector<4x256xf32>
    %58 = vector.extract_strided_slice %10 {offsets = [0, 7], sizes = [4, 1], strides = [1, 1]} : vector<4x9xf32> to vector<4x1xf32>
    %59 = vector.broadcast %58 : vector<4x1xf32> to vector<4x256xf32>
    %60 = arith.mulf %57, %59 : vector<4x256xf32>
    %61 = arith.addf %56, %60 : vector<4x256xf32>
    %62 = vector.extract_strided_slice %9 {offsets = [0, 145], sizes = [4, 256], strides = [1, 1]} : vector<4x512xf32> to vector<4x256xf32>
    %63 = vector.broadcast %1 : vector<1x256xf32> to vector<4x256xf32>
    %64 = arith.mulf %62, %63 : vector<4x256xf32>
    %65 = vector.extract_strided_slice %10 {offsets = [0, 8], sizes = [4, 1], strides = [1, 1]} : vector<4x9xf32> to vector<4x1xf32>
    %66 = vector.broadcast %65 : vector<4x1xf32> to vector<4x256xf32>
    %67 = arith.mulf %64, %66 : vector<4x256xf32>
    %68 = arith.addf %61, %67 : vector<4x256xf32>
    %c0_15 = arith.constant 0 : index
    %c0_16 = arith.constant 0 : index
    %69 = vector.load %arg4[%c0_15, %c0_16] : memref<8x4xf32, #tpu.memory_space<vmem>>, vector<8x4xf32>
    %cst_17 = arith.constant dense<0.000000e+00> : vector<8x256xf32>
    %70 = tpu.matmul %69, %68, %cst_17 {dimension_numbers = #tpu.dot_dimension_numbers<[1], [0], [0], [1], [0, 0, 1, 1], [], []>} : vector<8x4xf32>, vector<4x256xf32>, vector<8x256xf32> -> vector<8x256xf32>
    %c0_18 = arith.constant 0 : index
    %c0_19 = arith.constant 0 : index
    %71 = vector.load %arg5[%c0_18, %c0_19] : memref<8x1xf32, #tpu.memory_space<vmem>>, vector<8x1xf32>
    %72 = vector.broadcast %71 : vector<8x1xf32> to vector<8x256xf32>
    %73 = arith.addf %70, %72 : vector<8x256xf32>
    %cst_20 = arith.constant 3.000000e+00 : f32
    %74 = vector.broadcast %cst_20 : f32 to vector<8x256xf32>
    %75 = arith.addf %73, %74 : vector<8x256xf32>
    %cst_21 = arith.constant 0.000000e+00 : f32
    %cst_22 = arith.constant 6.000000e+00 : f32
    %76 = vector.broadcast %cst_21 : f32 to vector<8x256xf32>
    %77 = arith.maximumf %76, %75 : vector<8x256xf32>
    %78 = vector.broadcast %cst_22 : f32 to vector<8x256xf32>
    %79 = arith.minimumf %78, %77 : vector<8x256xf32>
    %80 = arith.mulf %73, %79 : vector<8x256xf32>
    %cst_23 = arith.constant 0.166666672 : f32
    %81 = vector.broadcast %cst_23 : f32 to vector<8x256xf32>
    %82 = arith.mulf %80, %81 : vector<8x256xf32>
    %cst_24 = arith.constant -1.000000e+30 : f32
    %83 = vector.broadcast %cst_24 : f32 to vector<8x128xf32>
    %c0_25 = arith.constant 0 : index
    %c0_26 = arith.constant 0 : index
    %84 = vector.load %arg11[%c0_25, %c0_26] : memref<8x512xf32, #tpu.memory_space<vmem>>, vector<8x128xf32>
    tpu.vector_store %arg11[%c0_25, %c0_26], %83 {strides = array<i32>} : memref<8x512xf32, #tpu.memory_space<vmem>>, vector<8x128xf32>,
    %cst_27 = arith.constant -1.000000e+30 : f32
    %85 = vector.broadcast %cst_27 : f32 to vector<8x128xf32>
    %c0_28 = arith.constant 0 : index
    %c384_29 = arith.constant 384 : index
    %86 = vector.load %arg11[%c0_28, %c384_29] : memref<8x512xf32, #tpu.memory_space<vmem>>, vector<8x128xf32>
    tpu.vector_store %arg11[%c0_28, %c384_29], %85 {strides = array<i32>} : memref<8x512xf32, #tpu.memory_space<vmem>>, vector<8x128xf32>,
    %c0_30 = arith.constant 0 : index
    %c128_31 = arith.constant 128 : index
    %87 = vector.load %arg11[%c0_30, %c128_31] : memref<8x512xf32, #tpu.memory_space<vmem>>, vector<8x256xf32>
    tpu.vector_store %arg11[%c0_30, %c128_31], %82 {strides = array<i32>} : memref<8x512xf32, #tpu.memory_space<vmem>>, vector<8x256xf32>,
    %c0_32 = arith.constant 0 : index
    %c0_33 = arith.constant 0 : index
    %88 = vector.load %arg11[%c0_32, %c0_33] : memref<8x512xf32, #tpu.memory_space<vmem>>, vector<8x512xf32>
    %89 = vector.extract_strided_slice %88 {offsets = [0, 111], sizes = [8, 256], strides = [1, 1]} : vector<8x512xf32> to vector<8x256xf32>
    %cst_34 = arith.constant 0.000000e+00 : f32
    %90 = vector.broadcast %cst_34 : f32 to vector<1x256xf32>
    %91 = arith.cmpf one, %0, %90 : vector<1x256xf32>
    %cst_35 = arith.constant -1.000000e+30 : f32
    %92 = vector.shape_cast %91 : vector<1x256xi1> to vector<1x256xi1>
    %93 = vector.broadcast %92 : vector<1x256xi1> to vector<8x256xi1>
    %94 = vector.broadcast %cst_35 : f32 to vector<8x256xf32>
    %95 = arith.select %93, %89, %94 : vector<8x256xi1>, vector<8x256xf32>
    %96 = vector.extract_strided_slice %88 {offsets = [0, 112], sizes = [8, 256], strides = [1, 1]} : vector<8x512xf32> to vector<8x256xf32>
    %97 = arith.maximumf %95, %96 : vector<8x256xf32>
    %98 = vector.extract_strided_slice %88 {offsets = [0, 113], sizes = [8, 256], strides = [1, 1]} : vector<8x512xf32> to vector<8x256xf32>
    %cst_36 = arith.constant 0.000000e+00 : f32
    %99 = vector.broadcast %cst_36 : f32 to vector<1x256xf32>
    %100 = arith.cmpf one, %1, %99 : vector<1x256xf32>
    %cst_37 = arith.constant -1.000000e+30 : f32
    %101 = vector.shape_cast %100 : vector<1x256xi1> to vector<1x256xi1>
    %102 = vector.broadcast %101 : vector<1x256xi1> to vector<8x256xi1>
    %103 = vector.broadcast %cst_37 : f32 to vector<8x256xf32>
    %104 = arith.select %102, %98, %103 : vector<8x256xi1>, vector<8x256xf32>
    %105 = arith.maximumf %97, %104 : vector<8x256xf32>
    %106 = vector.extract_strided_slice %88 {offsets = [0, 127], sizes = [8, 256], strides = [1, 1]} : vector<8x512xf32> to vector<8x256xf32>
    %cst_38 = arith.constant 0.000000e+00 : f32
    %107 = vector.broadcast %cst_38 : f32 to vector<1x256xf32>
    %108 = arith.cmpf one, %0, %107 : vector<1x256xf32>
    %cst_39 = arith.constant -1.000000e+30 : f32
    %109 = vector.shape_cast %108 : vector<1x256xi1> to vector<1x256xi1>
    %110 = vector.broadcast %109 : vector<1x256xi1> to vector<8x256xi1>
    %111 = vector.broadcast %cst_39 : f32 to vector<8x256xf32>
    %112 = arith.select %110, %106, %111 : vector<8x256xi1>, vector<8x256xf32>
    %113 = arith.maximumf %105, %112 : vector<8x256xf32>
    %114 = vector.extract_strided_slice %88 {offsets = [0, 128], sizes = [8, 256], strides = [1, 1]} : vector<8x512xf32> to vector<8x256xf32>
    %115 = arith.maximumf %113, %114 : vector<8x256xf32>
    %116 = vector.extract_strided_slice %88 {offsets = [0, 129], sizes = [8, 256], strides = [1, 1]} : vector<8x512xf32> to vector<8x256xf32>
    %cst_40 = arith.constant 0.000000e+00 : f32
    %117 = vector.broadcast %cst_40 : f32 to vector<1x256xf32>
    %118 = arith.cmpf one, %1, %117 : vector<1x256xf32>
    %cst_41 = arith.constant -1.000000e+30 : f32
    %119 = vector.shape_cast %118 : vector<1x256xi1> to vector<1x256xi1>
    %120 = vector.broadcast %119 : vector<1x256xi1> to vector<8x256xi1>
    %121 = vector.broadcast %cst_41 : f32 to vector<8x256xf32>
    %122 = arith.select %120, %116, %121 : vector<8x256xi1>, vector<8x256xf32>
    %123 = arith.maximumf %115, %122 : vector<8x256xf32>
    %124 = vector.extract_strided_slice %88 {offsets = [0, 143], sizes = [8, 256], strides = [1, 1]} : vector<8x512xf32> to vector<8x256xf32>
    %cst_42 = arith.constant 0.000000e+00 : f32
    %125 = vector.broadcast %cst_42 : f32 to vector<1x256xf32>
    %126 = arith.cmpf one, %0, %125 : vector<1x256xf32>
    %cst_43 = arith.constant -1.000000e+30 : f32
    %127 = vector.shape_cast %126 : vector<1x256xi1> to vector<1x256xi1>
    %128 = vector.broadcast %127 : vector<1x256xi1> to vector<8x256xi1>
    %129 = vector.broadcast %cst_43 : f32 to vector<8x256xf32>
    %130 = arith.select %128, %124, %129 : vector<8x256xi1>, vector<8x256xf32>
    %131 = arith.maximumf %123, %130 : vector<8x256xf32>
    %132 = vector.extract_strided_slice %88 {offsets = [0, 144], sizes = [8, 256], strides = [1, 1]} : vector<8x512xf32> to vector<8x256xf32>
    %133 = arith.maximumf %131, %132 : vector<8x256xf32>
    %134 = vector.extract_strided_slice %88 {offsets = [0, 145], sizes = [8, 256], strides = [1, 1]} : vector<8x512xf32> to vector<8x256xf32>
    %cst_44 = arith.constant 0.000000e+00 : f32
    %135 = vector.broadcast %cst_44 : f32 to vector<1x256xf32>
    %136 = arith.cmpf one, %1, %135 : vector<1x256xf32>
    %cst_45 = arith.constant -1.000000e+30 : f32
    %137 = vector.shape_cast %136 : vector<1x256xi1> to vector<1x256xi1>
    %138 = vector.broadcast %137 : vector<1x256xi1> to vector<8x256xi1>
    %139 = vector.broadcast %cst_45 : f32 to vector<8x256xf32>
    %140 = arith.select %138, %134, %139 : vector<8x256xi1>, vector<8x256xf32>
    %141 = arith.maximumf %133, %140 : vector<8x256xf32>
    %c0_46 = arith.constant 0 : index
    %c0_47 = arith.constant 0 : index
    %142 = vector.load %arg6[%c0_46, %c0_47] : memref<256x64xf32, #tpu.memory_space<vmem>>, vector<256x64xf32>
    %cst_48 = arith.constant dense<0.000000e+00> : vector<8x64xf32>
    %143 = tpu.matmul %141, %142, %cst_48 {dimension_numbers = #tpu.dot_dimension_numbers<[1], [0], [0], [1], [0, 0, 1, 1], [], []>} : vector<8x256xf32>, vector<256x64xf32>, vector<8x64xf32> -> vector<8x64xf32>
    %c0_49 = arith.constant 0 : index
    %c0_50 = arith.constant 0 : index
    %144 = vector.load %arg7[%c0_49, %c0_50] : memref<16x8xf32, #tpu.memory_space<vmem>>, vector<16x8xf32>
    %cst_51 = arith.constant dense<0.000000e+00> : vector<16x64xf32>
    %145 = tpu.matmul %144, %143, %cst_51 {dimension_numbers = #tpu.dot_dimension_numbers<[1], [0], [0], [1], [0, 0, 1, 1], [], []>} : vector<16x8xf32>, vector<8x64xf32>, vector<16x64xf32> -> vector<16x64xf32>
    %c0_52 = arith.constant 0 : index
    %c0_53 = arith.constant 0 : index
    %146 = vector.load %arg8[%c0_52, %c0_53] : memref<16x1xf32, #tpu.memory_space<vmem>>, vector<16x1xf32>
    %147 = vector.broadcast %146 : vector<16x1xf32> to vector<16x64xf32>
    %148 = arith.addf %145, %147 : vector<16x64xf32>
    %cst_54 = arith.constant 3.000000e+00 : f32
    %149 = vector.broadcast %cst_54 : f32 to vector<16x64xf32>
    %150 = arith.addf %148, %149 : vector<16x64xf32>
    %cst_55 = arith.constant 0.000000e+00 : f32
    %cst_56 = arith.constant 6.000000e+00 : f32
    %151 = vector.broadcast %cst_55 : f32 to vector<16x64xf32>
    %152 = arith.maximumf %151, %150 : vector<16x64xf32>
    %153 = vector.broadcast %cst_56 : f32 to vector<16x64xf32>
    %154 = arith.minimumf %153, %152 : vector<16x64xf32>
    %155 = arith.mulf %148, %154 : vector<16x64xf32>
    %cst_57 = arith.constant 0.166666672 : f32
    %156 = vector.broadcast %cst_57 : f32 to vector<16x64xf32>
    %157 = arith.mulf %155, %156 : vector<16x64xf32>
    %c0_58 = arith.constant 0 : index
    %c0_59 = arith.constant 0 : index
    %c0_60 = arith.constant 0 : index
    %158 = vector.load %arg9[%c0_58, %c0_59, %c0_60] : memref<1x16x64xf32, #tpu.memory_space<vmem>>, vector<1x16x64xf32>
    %159 = vector.shape_cast %158 : vector<1x16x64xf32> to vector<16x64xf32>
    %160 = vector.shape_cast %157 : vector<16x64xf32> to vector<1x16x64xf32>
    tpu.vector_store %arg9[%c0_58, %c0_59, %c0_60], %160 {strides = array<i32>} : memref<1x16x64xf32, #tpu.memory_space<vmem>>, vector<1x16x64xf32>,
    return
  }
  func.func @transform_0(%arg0: i32) -> (i32, i32, i32) {
    %c0_i32 = arith.constant 0 : i32
    %c0_i32_0 = arith.constant 0 : i32
    %c0_i32_1 = arith.constant 0 : i32
    return %arg0, %c0_i32, %c0_i32_0 : i32, i32, i32
  }
  func.func @transform_1(%arg0: i32) -> (i32, i32) {
    %c0_i32 = arith.constant 0 : i32
    %c0_i32_0 = arith.constant 0 : i32
    %c0_i32_1 = arith.constant 0 : i32
    return %c0_i32, %c0_i32_0 : i32, i32
  }
  func.func @transform_2(%arg0: i32) -> (i32, i32) {
    %c0_i32 = arith.constant 0 : i32
    %c0_i32_0 = arith.constant 0 : i32
    %c0_i32_1 = arith.constant 0 : i32
    return %c0_i32, %c0_i32_0 : i32, i32
  }
  func.func @transform_3(%arg0: i32) -> (i32, i32) {
    %c0_i32 = arith.constant 0 : i32
    %c0_i32_0 = arith.constant 0 : i32
    %c0_i32_1 = arith.constant 0 : i32
    return %c0_i32, %c0_i32_0 : i32, i32
  }
  func.func @transform_4(%arg0: i32) -> (i32, i32) {
    %c0_i32 = arith.constant 0 : i32
    %c0_i32_0 = arith.constant 0 : i32
    %c0_i32_1 = arith.constant 0 : i32
    return %c0_i32, %c0_i32_0 : i32, i32
  }
  func.func @transform_5(%arg0: i32) -> (i32, i32) {
    %c0_i32 = arith.constant 0 : i32
    %c0_i32_0 = arith.constant 0 : i32
    %c0_i32_1 = arith.constant 0 : i32
    return %c0_i32, %c0_i32_0 : i32, i32
  }
  func.func @transform_6(%arg0: i32) -> (i32, i32) {
    %c0_i32 = arith.constant 0 : i32
    %c0_i32_0 = arith.constant 0 : i32
    %c0_i32_1 = arith.constant 0 : i32
    return %c0_i32, %c0_i32_0 : i32, i32
  }
  func.func @transform_7(%arg0: i32) -> (i32, i32) {
    %c0_i32 = arith.constant 0 : i32
    %c0_i32_0 = arith.constant 0 : i32
    %c0_i32_1 = arith.constant 0 : i32
    return %c0_i32, %c0_i32_0 : i32, i32
  }
  func.func @transform_8(%arg0: i32) -> (i32, i32, i32) {
    %c0_i32 = arith.constant 0 : i32
    %c0_i32_0 = arith.constant 0 : i32
    %c0_i32_1 = arith.constant 0 : i32
    return %arg0, %c0_i32, %c0_i32_0 : i32, i32, i32
  }
}

</mosaic_0001>

<llo_original>
// kernel: skip_block_forward.1
$region0: #{skip_block_forward.1}
  #allocation0 [shape = 'u32[]', space=smem, size = 0x4, offset = 0x4, fixed_abs, tag = 'smem constant byte address 0x4 - core index']
  #allocation1 [shape = 'u32[144,128]{1,0:T(1,128)}', space=vmem, size = 0x12000, scoped, tag = 'internal scratch']
  #allocation2 [shape = 'f32[4,512]{1,0:T(4,128)}', space=vmem, size = 0x2000, scoped, tag = 'scratch operand']
  #allocation3 [shape = 'f32[8,512]{1,0:T(8,128)}', space=vmem, size = 0x4000, scoped, tag = 'scratch operand']
  %s0 = inlined_call_operand.vmem [shape: f32[2,4,256], index: 0, kind: input, shape index: {}]
  %s1 = inlined_call_operand.vmem [shape: f32[4,9], index: 1, kind: input, shape index: {}]
  %s2 = inlined_call_operand.vmem [shape: f32[2,256], index: 2, kind: input, shape index: {}]
  %s3 = inlined_call_operand.vmem [shape: f32[8,4], index: 3, kind: input, shape index: {}]
  %s4 = inlined_call_operand.vmem [shape: f32[8,1], index: 4, kind: input, shape index: {}]
  %s5 = inlined_call_operand.vmem [shape: f32[256,64], index: 5, kind: input, shape index: {}]
  %s6 = inlined_call_operand.vmem [shape: f32[16,8], index: 6, kind: input, shape index: {}]
  %s7 = inlined_call_operand.vmem [shape: f32[16,1], index: 7, kind: input, shape index: {}]
  %s8 = inlined_call_operand.vmem [shape: f32[2,16,64], index: 8, kind: output, shape index: {}]
  %s9 = sld [smem:[#allocation0]]
  $region65: #{skip_block_forward.1} parent=0
    _
  %s11 = ssub.s32 1, %s9
  %s12 = scalar_select 0, %s11, %s9
  loop: start=0, step=1, limit=4
  $region2: #{skip_block_forward.1} parent=0 // loop_pre_header
    _
  $region3: #{skip_block_forward.1} parent=0 // loop_header
    %s14 = sphi 0, %s18
    %p15 = scmp.ge.s32.totalorder %s14, 4
    %s24 = sphi 0, %s26
    %s27 = sphi 0, %s24
    %s28 = sphi 0, %s27
    %s44 = sphi 0, %s28
    %s48 = sphi 0, %s48
    %s50 = sphi 0, %s48
    %s51 = sphi 0, %s50
    %s65 = sphi 0, %s51
    %s69 = sphi 0, %s69
    %s71 = sphi 0, %s69
    %s72 = sphi 0, %s71
    %s86 = sphi 0, %s72
    %s90 = sphi 0, %s90
    %s92 = sphi 0, %s90
    %s93 = sphi 0, %s92
    %s107 = sphi 0, %s93
    %s111 = sphi 0, %s111
    %s113 = sphi 0, %s111
    %s114 = sphi 0, %s113
    %s128 = sphi 0, %s114
    %s132 = sphi 0, %s132
    %s134 = sphi 0, %s132
    %s135 = sphi 0, %s134
    %s149 = sphi 0, %s135
    %s153 = sphi 0, %s153
    %s155 = sphi 0, %s153
    %s156 = sphi 0, %s155
    %s170 = sphi 0, %s156
    %s174 = sphi 0, %s174
    %s176 = sphi 0, %s174
    %s177 = sphi 0, %s176
    %s191 = sphi 0, %s177
    %s197 = sphi 0, %s199
    %s200 = sphi 0, %s197
    %s201 = sphi 0, %s200
    %s217 = sphi 0, %s201
  $region4: #{skip_block_forward.1} parent=0 // loop_header_branch
    %17 = sbr.rel (%p15) target = $region8
  $region5: #{skip_block_forward.1} parent=0 // loop_body
    %s19 = ssub.s32 %s14, 1
    %s20 = ssub.s32 %s14, 2
    %s21 = sadd.s32 %s14, 1
    %s22 = ssub.s32 %s14, %s21
    %p23 = scmp.eq.s32.totalorder %s22, 0
    %s25 = sadd.s32 %s24, 1
    %s26 = scalar_select %p23, %s24, %s25
    %p29 = pneg %p23
    %p30 = scmp.eq.s32.totalorder %s14, 1
    %p31 = por %p29, %p30
    %p32 = scmp.ne.s32.totalorder %s24, %s27
    %p33 = scmp.eq.s32.totalorder %s14, 0
    %p34 = por %p32, %p33
    %p35 = scmp.ne.s32.totalorder %s24, %s27
    %p36 = scmp.eq.s32.totalorder %s19, 1
    %p37 = por %p35, %p36
    %p38 = scmp.ne.s32.totalorder %s27, %s28
    %p39 = scmp.eq.s32.totalorder %s19, 0
    %p40 = por %p38, %p39
    %p41 = scmp.ne.s32.totalorder %s27, %s28
    %p42 = scmp.eq.s32.totalorder %s20, 1
    %p43 = por %p41, %p42
    %p45 = scmp.ne.s32.totalorder %s28, %s44
    %p46 = scmp.eq.s32.totalorder %s20, 0
    %p47 = por %p45, %p46
    %s49 = sadd.s32 %s48, 1
    %p52 = scmp.eq.s32.totalorder %s14, 1
    %p53 = scmp.ne.s32.totalorder %s48, %s50
    %p54 = scmp.eq.s32.totalorder %s14, 0
    %p55 = por %p53, %p54
    %p56 = scmp.ne.s32.totalorder %s48, %s50
    %p57 = scmp.eq.s32.totalorder %s19, 1
    %p58 = por %p56, %p57
    %p59 = scmp.ne.s32.totalorder %s50, %s51
    %p60 = scmp.eq.s32.totalorder %s19, 0
    %p61 = por %p59, %p60
    %p62 = scmp.ne.s32.totalorder %s50, %s51
    %p63 = scmp.eq.s32.totalorder %s20, 1
    %p64 = por %p62, %p63
    %p66 = scmp.ne.s32.totalorder %s51, %s65
    %p67 = scmp.eq.s32.totalorder %s20, 0
    %p68 = por %p66, %p67
    %s70 = sadd.s32 %s69, 1
    %p73 = scmp.eq.s32.totalorder %s14, 1
    %p74 = scmp.ne.s32.totalorder %s69, %s71
    %p75 = scmp.eq.s32.totalorder %s14, 0
    %p76 = por %p74, %p75
    %p77 = scmp.ne.s32.totalorder %s69, %s71
    %p78 = scmp.eq.s32.totalorder %s19, 1
    %p79 = por %p77, %p78
    %p80 = scmp.ne.s32.totalorder %s71, %s72
    %p81 = scmp.eq.s32.totalorder %s19, 0
    %p82 = por %p80, %p81
    %p83 = scmp.ne.s32.totalorder %s71, %s72
    %p84 = scmp.eq.s32.totalorder %s20, 1
    %p85 = por %p83, %p84
    %p87 = scmp.ne.s32.totalorder %s72, %s86
    %p88 = scmp.eq.s32.totalorder %s20, 0
    %p89 = por %p87, %p88
    %s91 = sadd.s32 %s90, 1
    %p94 = scmp.eq.s32.totalorder %s14, 1
    %p95 = scmp.ne.s32.totalorder %s90, %s92
    %p96 = scmp.eq.s32.totalorder %s14, 0
    %p97 = por %p95, %p96
    %p98 = scmp.ne.s32.totalorder %s90, %s92
    %p99 = scmp.eq.s32.totalorder %s19, 1
    %p100 = por %p98, %p99
    %p101 = scmp.ne.s32.totalorder %s92, %s93
    %p102 = scmp.eq.s32.totalorder %s19, 0
    %p103 = por %p101, %p102
    %p104 = scmp.ne.s32.totalorder %s92, %s93
    %p105 = scmp.eq.s32.totalorder %s20, 1
    %p106 = por %p104, %p105
    %p108 = scmp.ne.s32.totalorder %s93, %s107
    %p109 = scmp.eq.s32.totalorder %s20, 0
    %p110 = por %p108, %p109
    %s112 = sadd.s32 %s111, 1
    %p115 = scmp.eq.s32.totalorder %s14, 1
    %p116 = scmp.ne.s32.totalorder %s111, %s113
    %p117 = scmp.eq.s32.totalorder %s14, 0
    %p118 = por %p116, %p117
    %p119 = scmp.ne.s32.totalorder %s111, %s113
    %p120 = scmp.eq.s32.totalorder %s19, 1
    %p121 = por %p119, %p120
    %p122 = scmp.ne.s32.totalorder %s113, %s114
    %p123 = scmp.eq.s32.totalorder %s19, 0
    %p124 = por %p122, %p123
    %p125 = scmp.ne.s32.totalorder %s113, %s114
    %p126 = scmp.eq.s32.totalorder %s20, 1
    %p127 = por %p125, %p126
    %p129 = scmp.ne.s32.totalorder %s114, %s128
    %p130 = scmp.eq.s32.totalorder %s20, 0
    %p131 = por %p129, %p130
    %s133 = sadd.s32 %s132, 1
    %p136 = scmp.eq.s32.totalorder %s14, 1
    %p137 = scmp.ne.s32.totalorder %s132, %s134
    %p138 = scmp.eq.s32.totalorder %s14, 0
    %p139 = por %p137, %p138
    %p140 = scmp.ne.s32.totalorder %s132, %s134
    %p141 = scmp.eq.s32.totalorder %s19, 1
    %p142 = por %p140, %p141
    %p143 = scmp.ne.s32.totalorder %s134, %s135
    %p144 = scmp.eq.s32.totalorder %s19, 0
    %p145 = por %p143, %p144
    %p146 = scmp.ne.s32.totalorder %s134, %s135
    %p147 = scmp.eq.s32.totalorder %s20, 1
    %p148 = por %p146, %p147
    %p150 = scmp.ne.s32.totalorder %s135, %s149
    %p151 = scmp.eq.s32.totalorder %s20, 0
    %p152 = por %p150, %p151
    %s154 = sadd.s32 %s153, 1
    %p157 = scmp.eq.s32.totalorder %s14, 1
    %p158 = scmp.ne.s32.totalorder %s153, %s155
    %p159 = scmp.eq.s32.totalorder %s14, 0
    %p160 = por %p158, %p159
    %p161 = scmp.ne.s32.totalorder %s153, %s155
    %p162 = scmp.eq.s32.totalorder %s19, 1
    %p163 = por %p161, %p162
    %p164 = scmp.ne.s32.totalorder %s155, %s156
    %p165 = scmp.eq.s32.totalorder %s19, 0
    %p166 = por %p164, %p165
    %p167 = scmp.ne.s32.totalorder %s155, %s156
    %p168 = scmp.eq.s32.totalorder %s20, 1
    %p169 = por %p167, %p168
    %p171 = scmp.ne.s32.totalorder %s156, %s170
    %p172 = scmp.eq.s32.totalorder %s20, 0
    %p173 = por %p171, %p172
    %s175 = sadd.s32 %s174, 1
    %p178 = scmp.eq.s32.totalorder %s14, 1
    %p179 = scmp.ne.s32.totalorder %s174, %s176
    %p180 = scmp.eq.s32.totalorder %s14, 0
    %p181 = por %p179, %p180
    %p182 = scmp.ne.s32.totalorder %s174, %s176
    %p183 = scmp.eq.s32.totalorder %s19, 1
    %p184 = por %p182, %p183
    %p185 = scmp.ne.s32.totalorder %s176, %s177
    %p186 = scmp.eq.s32.totalorder %s19, 0
    %p187 = por %p185, %p186
    %p188 = scmp.ne.s32.totalorder %s176, %s177
    %p189 = scmp.eq.s32.totalorder %s20, 1
    %p190 = por %p188, %p189
    %p192 = scmp.ne.s32.totalorder %s177, %s191
    %p193 = scmp.eq.s32.totalorder %s20, 0
    %p194 = por %p192, %p193
    %s195 = ssub.s32 %s14, %s21
    %p196 = scmp.eq.s32.totalorder %s195, 0
    %s198 = sadd.s32 %s197, 1
    %s199 = scalar_select %p196, %s197, %s198
    %p202 = pneg %p196
    %p203 = scmp.eq.s32.totalorder %s14, 1
    %p204 = por %p202, %p203
    %p205 = scmp.ne.s32.totalorder %s197, %s200
    %p206 = scmp.eq.s32.totalorder %s14, 0
    %p207 = por %p205, %p206
    %p208 = scmp.ne.s32.totalorder %s197, %s200
    %p209 = scmp.eq.s32.totalorder %s19, 1
    %p210 = por %p208, %p209
    %p211 = scmp.ne.s32.totalorder %s200, %s201
    %p212 = scmp.eq.s32.totalorder %s19, 0
    %p213 = por %p211, %p212
    %p214 = scmp.ne.s32.totalorder %s200, %s201
    %p215 = scmp.eq.s32.totalorder %s20, 1
    %p216 = por %p214, %p215
    %p218 = scmp.ne.s32.totalorder %s201, %s217
    %p219 = scmp.eq.s32.totalorder %s20, 0
    %p220 = por %p218, %p219
    %p221 = scmp.le.s32.totalorder 1, %s14
    %p222 = scmp.lt.s32.totalorder %s14, 3
    %p223 = pnand %p221, %p222
    %p224 = pneg %p223
    // Predicated region
    $region9: #{skip_block_forward.1} parent=5 // pred_check
      _
    $region10: #{skip_block_forward.1} parent=5 // pred_check_branch
      %226 = sbr.rel (%p223) target = $region12
    $region11: #{skip_block_forward.1} parent=5 // pred_region
      %s227 = ssub.s32 %s14, 1
      // Predicated region
      $region13: #{skip_block_forward.1} parent=11 // pred_check
        %p228 = pneg %p61
      $region14: #{skip_block_forward.1} parent=11 // pred_check_branch
        %230 = sbr.rel (%p228) target = $region16
      $region15: #{skip_block_forward.1} parent=11 // pred_region
        _
      $region16: #{skip_block_forward.1} parent=11 // pred_fallthru
        _
      // Predicated region
      $region17: #{skip_block_forward.1} parent=11 // pred_check
        %p231 = pneg %p82
      $region18: #{skip_block_forward.1} parent=11 // pred_check_branch
        %233 = sbr.rel (%p231) target = $region20
      $region19: #{skip_block_forward.1} parent=11 // pred_region
        _
      $region20: #{skip_block_forward.1} parent=11 // pred_fallthru
        _
      // Predicated region
      $region21: #{skip_block_forward.1} parent=11 // pred_check
        %p234 = pneg %p103
      $region22: #{skip_block_forward.1} parent=11 // pred_check_branch
        %236 = sbr.rel (%p234) target = $region24
      $region23: #{skip_block_forward.1} parent=11 // pred_region
        _
      $region24: #{skip_block_forward.1} parent=11 // pred_fallthru
        _
      // Predicated region
      $region25: #{skip_block_forward.1} parent=11 // pred_check
        %p237 = pneg %p124
      $region26: #{skip_block_forward.1} parent=11 // pred_check_branch
        %239 = sbr.rel (%p237) target = $region28
      $region27: #{skip_block_forward.1} parent=11 // pred_region
        _
      $region28: #{skip_block_forward.1} parent=11 // pred_fallthru
        _
      // Predicated region
      $region29: #{skip_block_forward.1} parent=11 // pred_check
        %p240 = pneg %p145
      $region30: #{skip_block_forward.1} parent=11 // pred_check_branch
        %242 = sbr.rel (%p240) target = $region32
      $region31: #{skip_block_forward.1} parent=11 // pred_region
        _
      $region32: #{skip_block_forward.1} parent=11 // pred_fallthru
        _
      // Predicated region
      $region33: #{skip_block_forward.1} parent=11 // pred_check
        %p243 = pneg %p166
      $region34: #{skip_block_forward.1} parent=11 // pred_check_branch
        %245 = sbr.rel (%p243) target = $region36
      $region35: #{skip_block_forward.1} parent=11 // pred_region
        _
      $region36: #{skip_block_forward.1} parent=11 // pred_fallthru
        _
      // Predicated region
      $region37: #{skip_block_forward.1} parent=11 // pred_check
        %p246 = pneg %p187
      $region38: #{skip_block_forward.1} parent=11 // pred_check_branch
        %248 = sbr.rel (%p246) target = $region40
      $region39: #{skip_block_forward.1} parent=11 // pred_region
        _
      $region40: #{skip_block_forward.1} parent=11 // pred_fallthru
        _
    $region12: #{skip_block_forward.1} parent=5 // pred_fallthru
      _
    %p249 = scmp.lt.s32.totalorder %s14, 2
    // Predicated region
    $region41: #{skip_block_forward.1} parent=5 // pred_check
      %p250 = pneg %p249
    $region42: #{skip_block_forward.1} parent=5 // pred_check_branch
      %252 = sbr.rel (%p250) target = $region44
    $region43: #{skip_block_forward.1} parent=5 // pred_region
      // Predicated region
      $region45: #{skip_block_forward.1} parent=43 // pred_check
        %p253 = pneg %p34
      $region46: #{skip_block_forward.1} parent=43 // pred_check_branch
        %255 = sbr.rel (%p253) target = $region48
      $region47: #{skip_block_forward.1} parent=43 // pred_region
        %p256 = scmp.lt.s32.totalorder %s14, 1
        %s257 = scalar_select %p256, %s14, 1
        %s258 = smul.addr %s257, 2
        %s259 = smul.addr %s258, 4
        %s260 = scalar_lea.vmem %s0, %s259
      $region48: #{skip_block_forward.1} parent=43 // pred_fallthru
        _
    $region44: #{skip_block_forward.1} parent=5 // pred_fallthru
      _
    %p261 = scmp.le.s32.totalorder 1, %s14
    %p262 = scmp.lt.s32.totalorder %s14, 3
    %p263 = pnand %p261, %p262
    %p264 = pneg %p263
    // Predicated region
    $region49: #{skip_block_forward.1} parent=5 // pred_check
      _
    $region50: #{skip_block_forward.1} parent=5 // pred_check_branch
      %266 = sbr.rel (%p263) target = $region52
    $region51: #{skip_block_forward.1} parent=5 // pred_region
      %s267 = ssub.s32 %s14, 1
      %p268 = scmp.lt.s32.totalorder %s19, 1
      %s269 = scalar_select %p268, %s19, 1
      %s270 = smul.addr %s269, 2
      %s271 = smul.addr %s270, 4
      %s272 = scalar_lea.vmem %s0, %s271
      %p273 = pneg %p40
      %p274 = pneg %p37
      %p275 = pneg %p61
      %p276 = pneg %p58
      %p277 = pneg %p82
      %p278 = pneg %p79
      %p279 = pneg %p103
      %p280 = pneg %p100
      %p281 = pneg %p124
      %p282 = pneg %p121
      %p283 = pneg %p145
      %p284 = pneg %p142
      %p285 = pneg %p166
      %p286 = pneg %p163
      %p287 = pneg %p187
      %p288 = pneg %p184
      %p289 = pneg %p213
      %p290 = pneg %p210
      %p291 = scmp.lt.s32.totalorder %s19, 1
      %s292 = scalar_select %p291, %s19, 1
      %s293 = smul.addr %s292, 2
      %s294 = smul.addr %s293, 8
      %s295 = scalar_lea.vmem %s8, %s294
      %p296 = scmp.lt.s32.totalorder %s19, 1
      %s297 = scalar_select %p296, %s19, 1
      %s298 = smul.addr %s297, 2
      %s299 = smul.addr %s298, 4
      %s300 = scalar_lea.vmem %s0, %s299
      %p301 = scmp.lt.s32.totalorder %s19, 1
      %s302 = scalar_select %p301, %s19, 1
      %s303 = smul.addr %s302, 2
      %s304 = smul.addr %s303, 8
      %s305 = scalar_lea.vmem %s8, %s304
      %v306 = vld [vmem:[%s2] ss:$2 sm:$0x3]
      %s307 = scalar_lea.vmem %s2, 1
      %v308 = vld [vmem:[%s307] ss:$2 sm:$0x3]
      %309 = vst [vmem:[#allocation2] sm:$0xf] 0.0
      %310 = vst [vmem:[#allocation2 + $0xc] sm:$0xf] 0.0
      %v311 = vld [vmem:[%s300] sm:$0xff]
      %312 = vst [vmem:[#allocation2 + $0x4] sm:$0xff] %v311
      %v313 = vld [vmem:[#allocation2] sm:$0xff]
      %v314 = vld [vmem:[#allocation2 + $0x8] sm:$0xff]
      %v315 = vld [vmem:[%s1] sm:$0xf]
      %v317 = vlaneseq
      %v318 = vshrl.u32 %v317, 7
      %v319 = vsub.s32 0, %v318
      %v320 = vrot.slane %v306, %v319
      %v321 = vlaneseq
      %v322 = vshrl.u32 %v321, 7
      %v323 = vsub.s32 1, %v322
      %v324 = vrot.slane %v306, %v323
      %v325 = vcombine.low %v320, %v324
      %326 = vrot.lane.b32.xlu0 %v325, 111
      %v327 = vpop.permute.xlu0 %326
      %v328 = vrot.slane %v327, 4
      %vm329 = vcmask 908288
      %v330 = vsel %vm329, %v328, %v327
      %v333 = vmul.f32 %v313, %v330
      %v334 = vmul.f32 %v314, %v328
      %336 = vset.pattern.permute.xlu0 0
      %337 = vperm.xlu0 %336, %v315
      %v338 = vpop.permute.xlu0 %337
      %v340 = vunpack.c.l.s4 839922192
      %v341 = vunpack.c.0.s8 %v340
      %v342 = vlaneseq
      %v343 = vshrl.u32 %v342, 7
      %v344 = vsub.s32 %v341, %v343
      %v345 = vrot.slane %v338, %v344
      %v347 = vmul.f32 %v333, %v345
      %v348 = vmul.f32 %v334, %v345
      %v349 = vadd.f32 %v347, 0.0
      %v350 = vadd.f32 %v348, 0.0
      %351 = vset.pattern.permute.xlu0 1
      %352 = vperm.xlu0 %351, %v315
      %v353 = vpop.permute.xlu0 %352
      %v355 = vunpack.c.l.s4 839922192
      %v356 = vunpack.c.0.s8 %v355
      %v357 = vlaneseq
      %v358 = vshrl.u32 %v357, 7
      %v359 = vsub.s32 %v356, %v358
      %v360 = vrot.slane %v353, %v359
      %v362 = vmul.f32 %v313, %v360
      %v363 = vmul.f32 %v314, %v360
      %366 = vrot.lane.b32.xlu0 %v362, 127
      %v367 = vpop.permute.xlu0 %366
      %368 = vrot.lane.b32.xlu0 %v363, 127
      %v369 = vpop.permute.xlu0 %368
      %v370 = vrot.slane %v367, 4
      %v371 = vrot.slane %v369, 4
      %vm372 = vcmask 1043456
      %v373 = vsel %vm372, %v370, %v371
      %vm374 = vcmask 1039360
      %v375 = vsel %vm374, %v367, %v373
      %v378 = vadd.f32 %v349, %v375
      %v379 = vadd.f32 %v350, %v369
      %v381 = vlaneseq
      %v382 = vshrl.u32 %v381, 7
      %v383 = vsub.s32 0, %v382
      %v384 = vrot.slane %v308, %v383
      %v385 = vlaneseq
      %v386 = vshrl.u32 %v385, 7
      %v387 = vsub.s32 1, %v386
      %v388 = vrot.slane %v308, %v387
      %v389 = vcombine.low %v384, %v388
      %390 = vrot.lane.b32.xlu0 %v389, 113
      %v391 = vpop.permute.xlu0 %390
      %v392 = vrot.slane %v391, 4
      %vm393 = vcmask 924672
      %v394 = vsel %vm393, %v392, %v391
      %v397 = vmul.f32 %v313, %v394
      %v398 = vmul.f32 %v314, %v392
      %399 = vset.pattern.permute.xlu0 2
      %400 = vperm.xlu0 %399, %v315
      %v401 = vpop.permute.xlu0 %400
      %v403 = vunpack.c.l.s4 839922192
      %v404 = vunpack.c.0.s8 %v403
      %v405 = vlaneseq
      %v406 = vshrl.u32 %v405, 7
      %v407 = vsub.s32 %v404, %v406
      %v408 = vrot.slane %v401, %v407
      %v410 = vmul.f32 %v397, %v408
      %v411 = vmul.f32 %v398, %v408
      %414 = vrot.lane.b32.xlu0 %v410, 126
      %v415 = vpop.permute.xlu0 %414
      %416 = vrot.lane.b32.xlu0 %v411, 126
      %v417 = vpop.permute.xlu0 %416
      %v418 = vrot.slane %v415, 4
      %v419 = vrot.slane %v417, 4
      %v420 = vsel %vm372, %v418, %v419
      %vm421 = vcmask 1031168
      %v422 = vsel %vm421, %v415, %v420
      %v425 = vadd.f32 %v378, %v422
      %v426 = vadd.f32 %v379, %v417
      %427 = vrot.lane.b32.xlu0 %v325, 127
      %v428 = vpop.permute.xlu0 %427
      %v429 = vrot.slane %v428, 4
      %v430 = vsel %vm374, %v429, %v428
      %v433 = vmul.f32 %v313, %v430
      %v434 = vmul.f32 %v314, %v429
      %435 = vset.pattern.permute.xlu0 3
      %436 = vperm.xlu0 %435, %v315
      %v437 = vpop.permute.xlu0 %436
      %v439 = vunpack.c.l.s4 839922192
      %v440 = vunpack.c.0.s8 %v439
      %v441 = vlaneseq
      %v442 = vshrl.u32 %v441, 7
      %v443 = vsub.s32 %v440, %v442
      %v444 = vrot.slane %v437, %v443
      %v446 = vmul.f32 %v433, %v444
      %v447 = vmul.f32 %v434, %v444
      %450 = vrot.lane.b32.xlu0 %v446, 112
      %v451 = vpop.permute.xlu0 %450
      %452 = vrot.lane.b32.xlu0 %v447, 112
      %v453 = vpop.permute.xlu0 %452
      %v454 = vrot.slane %v451, 4
      %v455 = vrot.slane %v453, 4
      %v456 = vsel %vm372, %v454, %v455
      %vm457 = vcmask 916480
      %v458 = vsel %vm457, %v451, %v456
      %v461 = vadd.f32 %v425, %v458
      %v462 = vadd.f32 %v426, %v453
      %463 = vset.pattern.permute.xlu0 4
      %464 = vperm.xlu0 %463, %v315
      %v465 = vpop.permute.xlu0 %464
      %v468 = vrot.slane %v313, 4
      %v469 = vrot.slane %v314, 4
      %v470 = vsel %vm372, %v468, %v469
      %v473 = vunpack.c.l.s4 839922192
      %v474 = vunpack.c.0.s8 %v473
      %v475 = vlaneseq
      %v476 = vshrl.u32 %v475, 7
      %v477 = vsub.s32 %v474, %v476
      %v478 = vrot.slane %v465, %v477
      %v480 = vmul.f32 %v470, %v478
      %482 = vrot.lane.b32.xlu0 %v480, 111
      %v483 = vpop.permute.xlu0 %482
      %v484 = vrot.slane %v483, 4
      %v485 = vsel %vm329, %v484, %v483
      %v488 = vadd.f32 %v461, %v485
      %v489 = vadd.f32 %v462, %v484
      %490 = vrot.lane.b32.xlu0 %v313, 127
      %v491 = vpop.permute.xlu0 %490
      %492 = vrot.lane.b32.xlu0 %v314, 127
      %v493 = vpop.permute.xlu0 %492
      %v494 = vrot.slane %v491, 4
      %v495 = vrot.slane %v493, 4
      %v496 = vsel %vm372, %v494, %v495
      %v497 = vsel %vm374, %v496, %v493
      %v500 = vmul.f32 %v497, %v389
      %501 = vset.pattern.permute.xlu0 5
      %502 = vperm.xlu0 %501, %v315
      %v503 = vpop.permute.xlu0 %502
      %v505 = vunpack.c.l.s4 839922192
      %v506 = vunpack.c.0.s8 %v505
      %v507 = vlaneseq
      %v508 = vshrl.u32 %v507, 7
      %v509 = vsub.s32 %v506, %v508
      %v510 = vrot.slane %v503, %v509
      %v512 = vmul.f32 %v500, %v510
      %514 = vrot.lane.b32.xlu0 %v512, 111
      %v515 = vpop.permute.xlu0 %514
      %v516 = vrot.slane %v515, 4
      %v517 = vsel %vm329, %v516, %v515
      %v520 = vadd.f32 %v488, %v517
      %v521 = vadd.f32 %v489, %v516
      %522 = vrot.lane.b32.xlu0 %v313, 113
      %v523 = vpop.permute.xlu0 %522
      %524 = vrot.lane.b32.xlu0 %v314, 113
      %v525 = vpop.permute.xlu0 %524
      %v526 = vrot.slane %v523, 4
      %v527 = vrot.slane %v525, 4
      %v528 = vsel %vm372, %v526, %v527
      %v529 = vsel %vm393, %v528, %v525
      %v532 = vmul.f32 %v529, %v325
      %533 = vset.pattern.permute.xlu0 6
      %534 = vperm.xlu0 %533, %v315
      %v535 = vpop.permute.xlu0 %534
      %v537 = vunpack.c.l.s4 839922192
      %v538 = vunpack.c.0.s8 %v537
      %v539 = vlaneseq
      %v540 = vshrl.u32 %v539, 7
      %v541 = vsub.s32 %v538, %v540
      %v542 = vrot.slane %v535, %v541
      %v544 = vmul.f32 %v532, %v542
      %546 = vrot.lane.b32.xlu0 %v544, 111
      %v547 = vpop.permute.xlu0 %546
      %v548 = vrot.slane %v547, 4
      %v549 = vsel %vm329, %v548, %v547
      %v552 = vadd.f32 %v520, %v549
      %v553 = vadd.f32 %v521, %v548
      %554 = vset.pattern.permute.xlu0 7
      %555 = vperm.xlu0 %554, %v315
      %v556 = vpop.permute.xlu0 %555
      %557 = vrot.lane.b32.xlu0 %v313, 112
      %v558 = vpop.permute.xlu0 %557
      %559 = vrot.lane.b32.xlu0 %v314, 112
      %v560 = vpop.permute.xlu0 %559
      %v561 = vrot.slane %v558, 4
      %v562 = vrot.slane %v560, 4
      %v563 = vsel %vm372, %v561, %v562
      %v564 = vsel %vm457, %v563, %v560
      %v567 = vunpack.c.l.s4 839922192
      %v568 = vunpack.c.0.s8 %v567
      %v569 = vlaneseq
      %v570 = vshrl.u32 %v569, 7
      %v571 = vsub.s32 %v568, %v570
      %v572 = vrot.slane %v556, %v571
      %v574 = vmul.f32 %v564, %v572
      %576 = vrot.lane.b32.xlu0 %v574, 111
      %v577 = vpop.permute.xlu0 %576
      %v578 = vrot.slane %v577, 4
      %v579 = vsel %vm329, %v578, %v577
      %v582 = vadd.f32 %v552, %v579
      %v583 = vadd.f32 %v553, %v578
      %584 = vrot.lane.b32.xlu0 %v313, 111
      %v585 = vpop.permute.xlu0 %584
      %586 = vrot.lane.b32.xlu0 %v314, 111
      %v587 = vpop.permute.xlu0 %586
      %v588 = vrot.slane %v585, 4
      %v589 = vrot.slane %v587, 4
      %v590 = vsel %vm372, %v588, %v589
      %v591 = vsel %vm329, %v590, %v587
      %v593 = vmul.f32 %v591, %v389
      %594 = vset.pattern.permute.xlu0 8
      %595 = vperm.xlu0 %594, %v315
      %v596 = vpop.permute.xlu0 %595
      %v598 = vunpack.c.l.s4 839922192
      %v599 = vunpack.c.0.s8 %v598
      %v600 = vlaneseq
      %v601 = vshrl.u32 %v600, 7
      %v602 = vsub.s32 %v599, %v601
      %v603 = vrot.slane %v596, %v602
      %v605 = vmul.f32 %v593, %v603
      %607 = vrot.lane.b32.xlu0 %v605, 111
      %v608 = vpop.permute.xlu0 %607
      %v609 = vrot.slane %v608, 4
      %v610 = vsel %vm329, %v609, %v608
      %v613 = vadd.f32 %v582, %v610
      %v614 = vadd.f32 %v583, %v609
      %v615 = vld [vmem:[%s3] sm:$0xff]
      %v616 = vld [vmem:[%s4] sm:$0xff]
      %618 = vset.pattern.permute.xlu0 0
      %619 = vperm.xlu0 %618, %v616
      %v620 = vpop.permute.xlu0 %619
      %v624 = vcombine.high %v613, %v613
      %625 = vrot.lane.b32.xlu0 %v613, 17
      %v626 = vpop.permute.xlu0 %625
      %627 = vrot.lane.b32.xlu0 %v624, 17
      %v628 = vpop.permute.xlu0 %627
      %629 = vrot.lane.b32.xlu0 %v614, 17
      %v630 = vpop.permute.xlu0 %629
      %vm631 = vcmask 138240
      %v632 = vsel %vm631, %v626, %v628
      %v633 = vsel %vm631, %v628, %v630
      %vm634 = vcmask 31744
      %v636 = vsel %vm634, %v615, 0
      %v638 = vsel %vm372, %v632, 0
      %v640 = vsel %vm372, %v633, 0
      %642 = vmatprep.subr.mxu0 %v640
      %643 = vmatpush1.msra.mxu0 %v638
      %644 = vmatprep.subr.mxu0 0.0
      %645 = vmatpush1.msra.mxu0 0.0
      %646 = vmatprep.subr.mxu0 0.0
      %647 = vmatpush1.msra.mxu0 0.0
      %648 = vmatprep.subr.mxu0 0.0
      %649 = vmatpush1.msra.mxu0 0.0
      %650 = vmatprep.subr.mxu0 0.0
      %651 = vmatpush1.msra.mxu0 0.0
      %652 = vmatprep.subr.mxu0 0.0
      %653 = vmatpush1.msra.mxu0 0.0
      %654 = vmatprep.subr.mxu0 0.0
      %655 = vmatpush1.msra.mxu0 0.0
      %656 = vmatprep.subr.mxu0 0.0
      %657 = vmatpush1.msra.mxu0 0.0
      %658 = vmatprep.subr.mxu0 0.0
      %659 = vmatpush1.msra.mxu0 0.0
      %660 = vmatprep.subr.mxu0 0.0
      %661 = vmatpush1.msra.mxu0 0.0
      %662 = vmatprep.subr.mxu0 0.0
      %663 = vmatpush1.msra.mxu0 0.0
      %664 = vmatprep.subr.mxu0 0.0
      %665 = vmatpush1.msra.mxu0 0.0
      %666 = vmatprep.subr.mxu0 0.0
      %667 = vmatpush1.msra.mxu0 0.0
      %668 = vmatprep.subr.mxu0 0.0
      %669 = vmatpush1.msra.mxu0 0.0
      %670 = vmatprep.subr.mxu0 0.0
      %671 = vmatpush1.msra.mxu0 0.0
      %672 = vmatprep.subr.mxu0 0.0
      %673 = vmatpush1.msra.mxu0 0.0
      %674 = vmatprep.subr.mxu0 0.0
      %675 = vmatpush1.msra.mxu0 0.0
      %676 = vmatprep.subr.mxu0 0.0
      %677 = vmatpush1.msra.mxu0 0.0
      %678 = vmatprep.subr.mxu0 0.0
      %679 = vmatpush1.msra.mxu0 0.0
      %680 = vmatprep.subr.mxu0 0.0
      %681 = vmatpush1.msra.mxu0 0.0
      %682 = vmatprep.subr.mxu0 0.0
      %683 = vmatpush1.msra.mxu0 0.0
      %684 = vmatprep.subr.mxu0 0.0
      %685 = vmatpush1.msra.mxu0 0.0
      %686 = vmatprep.subr.mxu0 0.0
      %687 = vmatpush1.msra.mxu0 0.0
      %688 = vmatprep.subr.mxu0 0.0
      %689 = vmatpush1.msra.mxu0 0.0
      %690 = vmatprep.subr.mxu0 0.0
      %691 = vmatpush1.msra.mxu0 0.0
      %692 = vmatprep.subr.mxu0 0.0
      %693 = vmatpush1.msra.mxu0 0.0
      %694 = vmatprep.subr.mxu0 0.0
      %695 = vmatpush1.msra.mxu0 0.0
      %696 = vmatprep.subr.mxu0 0.0
      %697 = vmatpush1.msra.mxu0 0.0
      %698 = vmatprep.subr.mxu0 0.0
      %699 = vmatpush1.msra.mxu0 0.0
      %700 = vmatprep.subr.mxu0 0.0
      %701 = vmatpush1.msra.mxu0 0.0
      %702 = vmatprep.subr.mxu0 0.0
      %703 = vmatpush1.msra.mxu0 0.0
      %704 = vmatprep.subr.mxu0 0.0
      %705 = vmatpush1.msra.mxu0 0.0
      %706 = vmatprep.mubr.f32.mxu0 0.0
      %707 = vmatmul.mubr.f32.gmra.mrb[0].mxu0 %v636
      %v708 = vpop.f32.mrb[0].mxu0
      %v709 = vadd.f32 %v620, %v708
      %v710 = vpop.f32.mrb[0].mxu0
      %v711 = vadd.f32 %v620, %v710
      %712 = vdwg.mxu0
      %v713 = vadd.f32 %v709, 3.0
      %v714 = vadd.f32 %v711, 3.0
      %v715 = vmax.f32 %v713, 0.0
      %v716 = vmax.f32 %v714, 0.0
      %v717 = vmin.f32 %v715, 6.0
      %v718 = vmin.f32 %v716, 6.0
      %v719 = vmul.f32 %v709, %v717
      %v720 = vmul.f32 %v711, %v718
      %v721 = vmul.f32 %v719, 0.16666667
      %v722 = vmul.f32 %v720, 0.16666667
      %723 = vst [vmem:[#allocation3] sm:$0xff] -1e+30
      %724 = vst [vmem:[#allocation3 + $0x18] sm:$0xff] -1e+30
      %725 = vst [vmem:[#allocation3 + $0x8] sm:$0xff] %v721
      %726 = vst [vmem:[#allocation3 + $0x10] sm:$0xff] %v722
      %v727 = vld [vmem:[#allocation3] sm:$0xff]
      %v728 = vld [vmem:[#allocation3 + $0x8] sm:$0xff]
      %v729 = vld [vmem:[#allocation3 + $0x10] sm:$0xff]
      %v730 = vld [vmem:[#allocation3 + $0x18] sm:$0xff]
      %vm731 = vcmp.ne.f32.partialorder %v306, 0.0
      %v732 = vsel %vm731, 1, 0
      %v733 = vlaneseq
      %v734 = vshrl.u32 %v733, 7
      %v735 = vsub.s32 0, %v734
      %v736 = vrot.slane %v732, %v735
      %v737 = vlaneseq
      %v738 = vshrl.u32 %v737, 7
      %v739 = vsub.s32 1, %v738
      %v740 = vrot.slane %v732, %v739
      %vm741 = vcmp.eq.s32.totalorder %v736, 1
      %vm742 = vcmp.eq.s32.totalorder %v740, 1
      %746 = vrot.lane.b32.xlu0 %v727, 17
      %v747 = vpop.permute.xlu0 %746
      %748 = vrot.lane.b32.xlu0 %v728, 17
      %v749 = vpop.permute.xlu0 %748
      %750 = vrot.lane.b32.xlu0 %v729, 17
      %v751 = vpop.permute.xlu0 %750
      %v752 = vsel %vm631, %v747, %v749
      %v753 = vsel %vm631, %v749, %v751
      %v756 = vsel %vm741, %v752, -1e+30
      %v757 = vsel %vm742, %v753, -1e+30
      %758 = vrot.lane.b32.xlu0 %v727, 16
      %v759 = vpop.permute.xlu0 %758
      %760 = vrot.lane.b32.xlu0 %v728, 16
      %v761 = vpop.permute.xlu0 %760
      %762 = vrot.lane.b32.xlu0 %v729, 16
      %v763 = vpop.permute.xlu0 %762
      %vm764 = vcmask 130048
      %v765 = vsel %vm764, %v759, %v761
      %v766 = vsel %vm764, %v761, %v763
      %v769 = vmax.f32 %v756, %v765
      %v770 = vmax.f32 %v757, %v766
      %vm771 = vcmp.ne.f32.partialorder %v308, 0.0
      %v772 = vsel %vm771, 1, 0
      %v773 = vlaneseq
      %v774 = vshrl.u32 %v773, 7
      %v775 = vsub.s32 0, %v774
      %v776 = vrot.slane %v772, %v775
      %v777 = vlaneseq
      %v778 = vshrl.u32 %v777, 7
      %v779 = vsub.s32 1, %v778
      %v780 = vrot.slane %v772, %v779
      %vm781 = vcmp.eq.s32.totalorder %v776, 1
      %vm782 = vcmp.eq.s32.totalorder %v780, 1
      %783 = vrot.lane.b32.xlu0 %v727, 15
      %v784 = vpop.permute.xlu0 %783
      %785 = vrot.lane.b32.xlu0 %v728, 15
      %v786 = vpop.permute.xlu0 %785
      %787 = vrot.lane.b32.xlu0 %v729, 15
      %v788 = vpop.permute.xlu0 %787
      %vm789 = vcmask 121856
      %v790 = vsel %vm789, %v784, %v786
      %v791 = vsel %vm789, %v786, %v788
      %v794 = vsel %vm781, %v790, -1e+30
      %v795 = vsel %vm782, %v791, -1e+30
      %v796 = vmax.f32 %v769, %v794
      %v797 = vmax.f32 %v770, %v795
      %798 = vrot.lane.b32.xlu0 %v727, 1
      %v799 = vpop.permute.xlu0 %798
      %800 = vrot.lane.b32.xlu0 %v728, 1
      %v801 = vpop.permute.xlu0 %800
      %802 = vrot.lane.b32.xlu0 %v729, 1
      %v803 = vpop.permute.xlu0 %802
      %vm804 = vcmask 7168
      %v805 = vsel %vm804, %v799, %v801
      %v806 = vsel %vm804, %v801, %v803
      %v809 = vsel %vm741, %v805, -1e+30
      %v810 = vsel %vm742, %v806, -1e+30
      %v811 = vmax.f32 %v796, %v809
      %v812 = vmax.f32 %v797, %v810
      %v813 = vmax.f32 %v811, %v728
      %v814 = vmax.f32 %v812, %v729
      %816 = vrot.lane.b32.xlu0 %v728, 127
      %v817 = vpop.permute.xlu0 %816
      %818 = vrot.lane.b32.xlu0 %v729, 127
      %v819 = vpop.permute.xlu0 %818
      %820 = vrot.lane.b32.xlu0 %v730, 127
      %v821 = vpop.permute.xlu0 %820
      %v822 = vsel %vm374, %v817, %v819
      %v823 = vsel %vm374, %v819, %v821
      %v826 = vsel %vm781, %v822, -1e+30
      %v827 = vsel %vm782, %v823, -1e+30
      %v828 = vmax.f32 %v813, %v826
      %v829 = vmax.f32 %v814, %v827
      %830 = vrot.lane.b32.xlu0 %v728, 113
      %v831 = vpop.permute.xlu0 %830
      %832 = vrot.lane.b32.xlu0 %v729, 113
      %v833 = vpop.permute.xlu0 %832
      %834 = vrot.lane.b32.xlu0 %v730, 113
      %v835 = vpop.permute.xlu0 %834
      %v836 = vsel %vm393, %v831, %v833
      %v837 = vsel %vm393, %v833, %v835
      %v840 = vsel %vm741, %v836, -1e+30
      %v841 = vsel %vm742, %v837, -1e+30
      %v842 = vmax.f32 %v828, %v840
      %v843 = vmax.f32 %v829, %v841
      %844 = vrot.lane.b32.xlu0 %v728, 112
      %v845 = vpop.permute.xlu0 %844
      %846 = vrot.lane.b32.xlu0 %v729, 112
      %v847 = vpop.permute.xlu0 %846
      %848 = vrot.lane.b32.xlu0 %v730, 112
      %v849 = vpop.permute.xlu0 %848
      %v850 = vsel %vm457, %v845, %v847
      %v851 = vsel %vm457, %v847, %v849
      %v854 = vmax.f32 %v842, %v850
      %v855 = vmax.f32 %v843, %v851
      %856 = vrot.lane.b32.xlu0 %v728, 111
      %v857 = vpop.permute.xlu0 %856
      %858 = vrot.lane.b32.xlu0 %v729, 111
      %v859 = vpop.permute.xlu0 %858
      %860 = vrot.lane.b32.xlu0 %v730, 111
      %v861 = vpop.permute.xlu0 %860
      %v862 = vsel %vm329, %v857, %v859
      %v863 = vsel %vm329, %v859, %v861
      %v866 = vsel %vm781, %v862, -1e+30
      %v867 = vsel %vm782, %v863, -1e+30
      %v868 = vmax.f32 %v854, %v866
      %v869 = vmax.f32 %v855, %v867
      %v870 = vld [vmem:[%s5] sm:$0xff]
      %v871 = vld [vmem:[%s5 + $0x8] sm:$0xff]
      %v872 = vld [vmem:[%s5 + $0x10] sm:$0xff]
      %v873 = vld [vmem:[%s5 + $0x18] sm:$0xff]
      %v874 = vld [vmem:[%s5 + $0x20] sm:$0xff]
      %v875 = vld [vmem:[%s5 + $0x28] sm:$0xff]
      %v876 = vld [vmem:[%s5 + $0x30] sm:$0xff]
      %v877 = vld [vmem:[%s5 + $0x38] sm:$0xff]
      %v878 = vld [vmem:[%s5 + $0x40] sm:$0xff]
      %v879 = vld [vmem:[%s5 + $0x48] sm:$0xff]
      %v880 = vld [vmem:[%s5 + $0x50] sm:$0xff]
      %v881 = vld [vmem:[%s5 + $0x58] sm:$0xff]
      %v882 = vld [vmem:[%s5 + $0x60] sm:$0xff]
      %v883 = vld [vmem:[%s5 + $0x68] sm:$0xff]
      %v884 = vld [vmem:[%s5 + $0x70] sm:$0xff]
      %v885 = vld [vmem:[%s5 + $0x78] sm:$0xff]
      %v886 = vld [vmem:[%s5 + $0x80] sm:$0xff]
      %v887 = vld [vmem:[%s5 + $0x88] sm:$0xff]
      %v888 = vld [vmem:[%s5 + $0x90] sm:$0xff]
      %v889 = vld [vmem:[%s5 + $0x98] sm:$0xff]
      %v890 = vld [vmem:[%s5 + $0xa0] sm:$0xff]
      %v891 = vld [vmem:[%s5 + $0xa8] sm:$0xff]
      %v892 = vld [vmem:[%s5 + $0xb0] sm:$0xff]
      %v893 = vld [vmem:[%s5 + $0xb8] sm:$0xff]
      %v894 = vld [vmem:[%s5 + $0xc0] sm:$0xff]
      %v895 = vld [vmem:[%s5 + $0xc8] sm:$0xff]
      %v896 = vld [vmem:[%s5 + $0xd0] sm:$0xff]
      %v897 = vld [vmem:[%s5 + $0xd8] sm:$0xff]
      %v898 = vld [vmem:[%s5 + $0xe0] sm:$0xff]
      %v899 = vld [vmem:[%s5 + $0xe8] sm:$0xff]
      %v900 = vld [vmem:[%s5 + $0xf0] sm:$0xff]
      %v901 = vld [vmem:[%s5 + $0xf8] sm:$0xff]
      %902 = vmatprep.subr.mxu0 0.0
      %903 = vmatpush1.msra.mxu0 %v870
      %904 = vmatprep.subr.mxu0 0.0
      %905 = vmatpush1.msra.mxu0 %v871
      %906 = vmatprep.subr.mxu0 0.0
      %907 = vmatpush1.msra.mxu0 %v872
      %908 = vmatprep.subr.mxu0 0.0
      %909 = vmatpush1.msra.mxu0 %v873
      %910 = vmatprep.subr.mxu0 0.0
      %911 = vmatpush1.msra.mxu0 %v874
      %912 = vmatprep.subr.mxu0 0.0
      %913 = vmatpush1.msra.mxu0 %v875
      %914 = vmatprep.subr.mxu0 0.0
      %915 = vmatpush1.msra.mxu0 %v876
      %916 = vmatprep.subr.mxu0 0.0
      %917 = vmatpush1.msra.mxu0 %v877
      %918 = vmatprep.subr.mxu0 0.0
      %919 = vmatpush1.msra.mxu0 %v878
      %920 = vmatprep.subr.mxu0 0.0
      %921 = vmatpush1.msra.mxu0 %v879
      %922 = vmatprep.subr.mxu0 0.0
      %923 = vmatpush1.msra.mxu0 %v880
      %924 = vmatprep.subr.mxu0 0.0
      %925 = vmatpush1.msra.mxu0 %v881
      %926 = vmatprep.subr.mxu0 0.0
      %927 = vmatpush1.msra.mxu0 %v882
      %928 = vmatprep.subr.mxu0 0.0
      %929 = vmatpush1.msra.mxu0 %v883
      %930 = vmatprep.subr.mxu0 0.0
      %931 = vmatpush1.msra.mxu0 %v884
      %932 = vmatprep.subr.mxu0 0.0
      %933 = vmatpush1.msra.mxu0 %v885
      %934 = vmatprep.subr.mxu0 0.0
      %935 = vmatpush1.msra.mxu0 %v886
      %936 = vmatprep.subr.mxu0 0.0
      %937 = vmatpush1.msra.mxu0 %v887
      %938 = vmatprep.subr.mxu0 0.0
      %939 = vmatpush1.msra.mxu0 %v888
      %940 = vmatprep.subr.mxu0 0.0
      %941 = vmatpush1.msra.mxu0 %v889
      %942 = vmatprep.subr.mxu0 0.0
      %943 = vmatpush1.msra.mxu0 %v890
      %944 = vmatprep.subr.mxu0 0.0
      %945 = vmatpush1.msra.mxu0 %v891
      %946 = vmatprep.subr.mxu0 0.0
      %947 = vmatpush1.msra.mxu0 %v892
      %948 = vmatprep.subr.mxu0 0.0
      %949 = vmatpush1.msra.mxu0 %v893
      %950 = vmatprep.subr.mxu0 0.0
      %951 = vmatpush1.msra.mxu0 %v894
      %952 = vmatprep.subr.mxu0 0.0
      %953 = vmatpush1.msra.mxu0 %v895
      %954 = vmatprep.subr.mxu0 0.0
      %955 = vmatpush1.msra.mxu0 %v896
      %956 = vmatprep.subr.mxu0 0.0
      %957 = vmatpush1.msra.mxu0 %v897
      %958 = vmatprep.subr.mxu0 0.0
      %959 = vmatpush1.msra.mxu0 %v898
      %960 = vmatprep.subr.mxu0 0.0
      %961 = vmatpush1.msra.mxu0 %v899
      %962 = vmatprep.subr.mxu0 0.0
      %963 = vmatpush1.msra.mxu0 %v900
      %964 = vmatprep.subr.mxu0 0.0
      %965 = vmatpush1.msra.mxu0 %v901
      %966 = vmatprep.mubr.f32.mxu0 %v869
      %967 = vmatmul.mubr.f32.gmra.mrb[0].mxu0 %v868
      %v968 = vpop.f32.mrb[0].mxu0
      %v969 = vadd.f32 0.0, %v968
      %v970 = vpop.f32.mrb[0].mxu0
      %971 = vdwg.mxu0
      %v972 = vld [vmem:[%s6] sm:$0xff]
      %v973 = vld [vmem:[%s6 + $0x8] sm:$0xff]
      %v974 = vld [vmem:[%s7] sm:$0xff]
      %v975 = vld [vmem:[%s7 + $0x8] sm:$0xff]
      %977 = vset.pattern.permute.xlu0 0
      %978 = vperm.xlu0 %977, %v974
      %v979 = vpop.permute.xlu0 %978
      %982 = vset.pattern.permute.xlu0 0
      %983 = vperm.xlu0 %982, %v975
      %v984 = vpop.permute.xlu0 %983
      %vm986 = vcmask 64512
      %v988 = vsel %vm986, %v972, 0
      %v991 = vsel %vm986, %v973, 0
      %993 = vmatprep.subr.mxu0 0.0
      %994 = vmatpush1.msra.mxu0 %v969
      %995 = vmatprep.subr.mxu0 0.0
      %996 = vmatpush1.msra.mxu0 0.0
      %997 = vmatprep.subr.mxu0 0.0
      %998 = vmatpush1.msra.mxu0 0.0
      %999 = vmatprep.subr.mxu0 0.0
      %1000 = vmatpush1.msra.mxu0 0.0
      %1001 = vmatprep.subr.mxu0 0.0
      %1002 = vmatpush1.msra.mxu0 0.0
      %1003 = vmatprep.subr.mxu0 0.0
      %1004 = vmatpush1.msra.mxu0 0.0
      %1005 = vmatprep.subr.mxu0 0.0
      %1006 = vmatpush1.msra.mxu0 0.0
      %1007 = vmatprep.subr.mxu0 0.0
      %1008 = vmatpush1.msra.mxu0 0.0
      %1009 = vmatprep.subr.mxu0 0.0
      %1010 = vmatpush1.msra.mxu0 0.0
      %1011 = vmatprep.subr.mxu0 0.0
      %1012 = vmatpush1.msra.mxu0 0.0
      %1013 = vmatprep.subr.mxu0 0.0
      %1014 = vmatpush1.msra.mxu0 0.0
      %1015 = vmatprep.subr.mxu0 0.0
      %1016 = vmatpush1.msra.mxu0 0.0
      %1017 = vmatprep.subr.mxu0 0.0
      %1018 = vmatpush1.msra.mxu0 0.0
      %1019 = vmatprep.subr.mxu0 0.0
      %1020 = vmatpush1.msra.mxu0 0.0
      %1021 = vmatprep.subr.mxu0 0.0
      %1022 = vmatpush1.msra.mxu0 0.0
      %1023 = vmatprep.subr.mxu0 0.0
      %1024 = vmatpush1.msra.mxu0 0.0
      %1025 = vmatprep.subr.mxu0 0.0
      %1026 = vmatpush1.msra.mxu0 0.0
      %1027 = vmatprep.subr.mxu0 0.0
      %1028 = vmatpush1.msra.mxu0 0.0
      %1029 = vmatprep.subr.mxu0 0.0
      %1030 = vmatpush1.msra.mxu0 0.0
      %1031 = vmatprep.subr.mxu0 0.0
      %1032 = vmatpush1.msra.mxu0 0.0
      %1033 = vmatprep.subr.mxu0 0.0
      %1034 = vmatpush1.msra.mxu0 0.0
      %1035 = vmatprep.subr.mxu0 0.0
      %1036 = vmatpush1.msra.mxu0 0.0
      %1037 = vmatprep.subr.mxu0 0.0
      %1038 = vmatpush1.msra.mxu0 0.0
      %1039 = vmatprep.subr.mxu0 0.0
      %1040 = vmatpush1.msra.mxu0 0.0
      %1041 = vmatprep.subr.mxu0 0.0
      %1042 = vmatpush1.msra.mxu0 0.0
      %1043 = vmatprep.subr.mxu0 0.0
      %1044 = vmatpush1.msra.mxu0 0.0
      %1045 = vmatprep.subr.mxu0 0.0
      %1046 = vmatpush1.msra.mxu0 0.0
      %1047 = vmatprep.subr.mxu0 0.0
      %1048 = vmatpush1.msra.mxu0 0.0
      %1049 = vmatprep.subr.mxu0 0.0
      %1050 = vmatpush1.msra.mxu0 0.0
      %1051 = vmatprep.subr.mxu0 0.0
      %1052 = vmatpush1.msra.mxu0 0.0
      %1053 = vmatprep.subr.mxu0 0.0
      %1054 = vmatpush1.msra.mxu0 0.0
      %1055 = vmatprep.subr.mxu0 0.0
      %1056 = vmatpush1.msra.mxu0 0.0
      %1057 = vmatprep.mubr.f32.mxu0 0.0
      %1058 = vmatmul.mubr.f32.gmra.mrb[0].mxu0 %v988
      %v1059 = vpop.f32.mrb[0].mxu0
      %v1060 = vadd.f32 %v979, %v1059
      %v1061 = vpop.f32.mrb[0].mxu0
      %1062 = vmatprep.mubr.f32.mxu0 0.0
      %1063 = vmatmul.mubr.f32.gmra.mrb[0].mxu0 %v991
      %v1064 = vpop.f32.mrb[0].mxu0
      %v1065 = vadd.f32 %v984, %v1064
      %v1066 = vpop.f32.mrb[0].mxu0
      %1067 = vdwg.mxu0
      %v1068 = vadd.f32 %v1060, 3.0
      %v1069 = vadd.f32 %v1065, 3.0
      %v1070 = vmax.f32 %v1068, 0.0
      %v1071 = vmax.f32 %v1069, 0.0
      %v1072 = vmin.f32 %v1070, 6.0
      %v1073 = vmin.f32 %v1071, 6.0
      %v1074 = vmul.f32 %v1060, %v1072
      %v1075 = vmul.f32 %v1065, %v1073
      %v1076 = vmul.f32 %v1074, 0.16666667
      %v1077 = vmul.f32 %v1075, 0.16666667
      %vm1078 = vcmask 523264
      %1079 = vst.msk [vmem:[%s305] sm:$0xff] %vm1078, %v1076
      %1080 = vst.msk [vmem:[%s305 + $0x8] sm:$0xff] %vm1078, %v1077
      %p1081 = scmp.lt.s32.totalorder %s19, 1
      %s1082 = scalar_select %p1081, %s19, 1
      %s1083 = smul.addr %s1082, 2
      %s1084 = smul.addr %s1083, 8
      %s1085 = scalar_lea.vmem %s8, %s1084
      // Predicated region
      $region53: #{skip_block_forward.1} parent=51 // pred_check
        %p1086 = pneg %p210
      $region54: #{skip_block_forward.1} parent=51 // pred_check_branch
        %1088 = sbr.rel (%p1086) target = $region56
      $region55: #{skip_block_forward.1} parent=51 // pred_region
        _
      $region56: #{skip_block_forward.1} parent=51 // pred_fallthru
        _
    $region52: #{skip_block_forward.1} parent=5 // pred_fallthru
      _
    %p1089 = scmp.le.s32.totalorder 2, %s14
    // Predicated region
    $region57: #{skip_block_forward.1} parent=5 // pred_check
      %p1090 = pneg %p1089
    $region58: #{skip_block_forward.1} parent=5 // pred_check_branch
      %1092 = sbr.rel (%p1090) target = $region60
    $region59: #{skip_block_forward.1} parent=5 // pred_region
      %s1093 = ssub.s32 %s14, 2
      // Predicated region
      $region61: #{skip_block_forward.1} parent=59 // pred_check
        %p1094 = pneg %p216
      $region62: #{skip_block_forward.1} parent=59 // pred_check_branch
        %1096 = sbr.rel (%p1094) target = $region64
      $region63: #{skip_block_forward.1} parent=59 // pred_region
        %p1097 = scmp.lt.s32.totalorder %s20, 1
        %s1098 = scalar_select %p1097, %s20, 1
        %s1099 = smul.addr %s1098, 2
        %s1100 = smul.addr %s1099, 8
        %s1101 = scalar_lea.vmem %s8, %s1100
      $region64: #{skip_block_forward.1} parent=59 // pred_fallthru
        _
    $region60: #{skip_block_forward.1} parent=5 // pred_fallthru
      _
  $region6: #{skip_block_forward.1} parent=0 // loop_footer
    %s18 = sadd.s32 1, %s14
  $region7: #{skip_block_forward.1} parent=0 // loop_footer_branch
    %13 = sbr.rel target = $region3
  $region8: #{skip_block_forward.1} parent=0 // loop_exit
    _

</llo_original>
